<compile_context>
chip_gen: v7x
topology: tpu7x:2x2x1
jax: 0.10.0
libtpu: 0.0.40
codegen_flags: <defaults>
</compile_context>

<pallas_src>
import jax
import jax.numpy as jnp
from jax.experimental import pallas as pl
from jax.experimental.pallas import tpu as pltpu

_MAX_BLOCK_ROWS = 128  # rows per grid step; keeps per-input blocks ~1-2 MiB (v7x-safe)


def _round_up(x, m):
    return -(-x // m) * m


def _attn_unit_kernel(enc_ref, dec_ref, wa_ref, wout_ref, bias_ref, pred_ref):
    """One row-block: fused two-branch attention + att/out Linears + log_softmax."""
    enc = enc_ref[...]                         # (2, bt, S, H)  [enc_s_top ; enc_2]
    dec = dec_ref[...]                         # (bt, H)
    h = dec.shape[-1]

    # Fused attention for BOTH branches: VPU broadcast-multiply + XLU reduces
    # (no degenerate per-row MXU matvecs).  dec is broadcast in-kernel, so the
    # wrapper never materializes concat([dec, dec]).
    scores = jnp.sum(enc * dec[None, :, None, :], axis=-1)           # (2, bt, S)
    m = jnp.max(scores, axis=-1, keepdims=True)
    e = jnp.exp(scores - m)
    attn = e / jnp.sum(e, axis=-1, keepdims=True)                    # exact divide
    ctx = jnp.sum(enc * attn[..., None], axis=2)                     # (2, bt, H)

    bias = bias_ref[...]                       # (2, O_pad) packed biases
    b_att = bias[0:1, :h]                      # (1, H)
    b_out = bias[1:2, :]                       # (1, O_pad)

    # hid = tanh([ctx, ctx2, dec] @ W_att^T + b) as three lane-aligned K=H dots
    # against the stacked (3, H, H) weight (one DMA).
    hid = jnp.tanh(
        jnp.dot(ctx[0], wa_ref[0], preferred_element_type=jnp.float32)
        + jnp.dot(ctx[1], wa_ref[1], preferred_element_type=jnp.float32)
        + jnp.dot(dec, wa_ref[2], preferred_element_type=jnp.float32)
        + b_att)                                                     # (bt, H)

    # Output Linear, lane-padded to O_pad (=128): padded W_out columns are 0
    # and padded bias is -1e30, so padded logits never affect the max / LSE.
    logits = jnp.dot(hid, wout_ref[...],
                     preferred_element_type=jnp.float32) + b_out     # (bt, O_pad)
    lm = jnp.max(logits, axis=-1, keepdims=True)
    shifted = logits - lm
    lse = jnp.log(jnp.sum(jnp.exp(shifted), axis=-1, keepdims=True))
    pred_ref[...] = (shifted - lse).astype(pred_ref.dtype)
    # TODO(synk): opt.dropout_for_predict > 0 (nn.Dropout on hid) is not
    # implemented; this kernel covers the p == 0 inference/predict path.


def prepare_attn_params(w_att, b_att, w_out, b_out):
    """Per-model preprocessing.  Run ONCE at init, not per decode step."""
    hidden = w_att.shape[0]          # nn.Linear(3H -> H): weight (H, 3H)
    out_size = w_out.shape[0]        # nn.Linear(H -> O):  weight (O, H)
    o_pad = _round_up(max(out_size, 128), 128)
    assert hidden <= o_pad, "bias packing assumes hidden_size <= padded output width"

    # W_att split + pre-transposed into x @ W orientation, stacked as (3, H, H).
    wa3 = jnp.asarray(w_att, jnp.float32).T.reshape(3, hidden, hidden)
    # W_out pre-transposed + lane-padded so the final store is lane-dense.
    wout_t = (jnp.zeros((hidden, o_pad), jnp.float32)
              .at[:, :out_size].set(jnp.asarray(w_out, jnp.float32).T))
    # Both biases packed into one small buffer: row 0 = b_att (first H lanes),
    # row 1 = b_out with -1e30 in the padded lanes (ignored by log_softmax).
    bias = jnp.zeros((2, o_pad), jnp.float32)
    bias = bias.at[0, :hidden].set(jnp.asarray(b_att, jnp.float32))
    bias = bias.at[1, :].set(-1e30)
    bias = bias.at[1, :out_size].set(jnp.asarray(b_out, jnp.float32))
    return {"wa3": wa3, "wout_t": wout_t, "bias": bias, "out_size": out_size}


def prepare_encoders(enc_s_top, enc_2):
    """Per-sequence preprocessing (encoder outputs are invariant across decode
    steps): stack the two branches and pad rows to the block multiple ONCE."""
    b = enc_s_top.shape[0]
    bt = min(_MAX_BLOCK_ROWS, _round_up(b, 8))
    b_pad = _round_up(b, bt)
    enc = jnp.stack([jnp.asarray(enc_s_top, jnp.float32),
                     jnp.asarray(enc_2, jnp.float32)], axis=0)       # (2, B, S, H)
    if b_pad != b:
        enc = jnp.pad(enc, ((0, 0), (0, b_pad - b), (0, 0), (0, 0)))
    return enc                                                       # (2, B_pad, S, H)


def attn_unit_forward(enc_stacked, dec_s_top, params):
    """pred = log_softmax(Linear_out(tanh(Linear_att([ctx, ctx2, dec]))))."""
    _, b_pad, s, h = enc_stacked.shape
    b = dec_s_top.shape[0]
    o = params["out_size"]
    o_pad = params["wout_t"].shape[1]
    bt = min(_MAX_BLOCK_ROWS, b_pad)
    grid = (b_pad // bt,)

    dec = jnp.asarray(dec_s_top, jnp.float32)
    if b_pad != b:
        dec = jnp.pad(dec, ((0, b_pad - b), (0, 0)))

    pred_pad = pl.pallas_call(
        _attn_unit_kernel,
        out_shape=jax.ShapeDtypeStruct((b_pad, o_pad), jnp.float32),
        grid=grid,
        in_specs=[
            pl.BlockSpec((2, bt, s, h), lambda i: (0, i, 0, 0)),   # both enc branches
            pl.BlockSpec((bt, h), lambda i: (i, 0)),               # dec (passed once)
            pl.BlockSpec((3, h, h), lambda i: (0, 0, 0)),          # stacked W_att
            pl.BlockSpec((h, o_pad), lambda i: (0, 0)),            # W_out^T (padded)
            pl.BlockSpec((2, o_pad), lambda i: (0, 0)),            # packed biases
        ],
        out_specs=pl.BlockSpec((bt, o_pad), lambda i: (i, 0)),
        compiler_params=pltpu.CompilerParams(
            dimension_semantics=("parallel",)),   # shards row-blocks on v7x's 2 TCs
    )(enc_stacked, dec, params["wa3"], params["wout_t"], params["bias"])
    return pred_pad[:b, :o]


def _reference(enc_s_top, enc_2, dec_s_top, w_att, b_att, w_out, b_out):
    scores = jnp.einsum('bsh,bh->bs', enc_s_top, dec_s_top)
    attn = jax.nn.softmax(scores, axis=1)
    ctx = jnp.einsum('bsh,bs->bh', enc_s_top, attn)
    scores2 = jnp.einsum('bsh,bh->bs', enc_2, dec_s_top)
    attn2 = jax.nn.softmax(scores2, axis=1)
    ctx2 = jnp.einsum('bsh,bs->bh', enc_2, attn2)
    cat = jnp.concatenate([ctx, ctx2, dec_s_top], axis=1)
    hid = jnp.tanh(cat @ w_att.T + b_att)
    logits = hid @ w_out.T + b_out
    return jax.nn.log_softmax(logits, axis=1)


if __name__ == "__main__":
    B, S, H, O = 2, 8, 32, 16  # batch, seq, rnn_size, output_size

    key = jax.random.PRNGKey(0)
    k_enc, k_enc2, k_dec, k_wa, k_ba, k_wo, k_bo = jax.random.split(key, 7)

    enc_s_top = jax.random.normal(k_enc, (B, S, H), dtype=jnp.float32)
    enc_2 = jax.random.normal(k_enc2, (B, S, H), dtype=jnp.float32)
    dec_s_top = jax.random.normal(k_dec, (B, H), dtype=jnp.float32)

    w_att = 0.1 * jax.random.normal(k_wa, (H, 3 * H), dtype=jnp.float32)
    b_att = 0.1 * jax.random.normal(k_ba, (H,), dtype=jnp.float32)
    w_out = 0.1 * jax.random.normal(k_wo, (O, H), dtype=jnp.float32)
    b_out = 0.1 * jax.random.normal(k_bo, (O,), dtype=jnp.float32)

    params = prepare_attn_params(w_att, b_att, w_out, b_out)   # once at model init
    enc_stacked = prepare_encoders(enc_s_top, enc_2)           # once per sequence

    # Small-shape case (matches the module's typical B=2 decode step).
    pred = attn_unit_forward(enc_stacked, dec_s_top, params)
    jax.block_until_ready(pred)
    ref = _reference(enc_s_top, enc_2, dec_s_top, w_att, b_att, w_out, b_out)
    assert pred.shape == (B, O)
    assert jnp.allclose(pred, ref, atol=1e-4, rtol=1e-4)

    # Batched case: many decode rows in one gridded call (grid = 2 row-blocks,
    # "parallel" axis -> both TensorCores on v7x).
    Bb = 256
    kb_enc, kb_enc2, kb_dec = jax.random.split(jax.random.PRNGKey(1), 3)
    enc_b = jax.random.normal(kb_enc, (Bb, S, H), dtype=jnp.float32)
    enc2_b = jax.random.normal(kb_enc2, (Bb, S, H), dtype=jnp.float32)
    dec_b = jax.random.normal(kb_dec, (Bb, H), dtype=jnp.float32)
    enc_b_stacked = prepare_encoders(enc_b, enc2_b)
    pred_b = attn_unit_forward(enc_b_stacked, dec_b, params)
    jax.block_until_ready(pred_b)
    ref_b = _reference(enc_b, enc2_b, dec_b, w_att, b_att, w_out, b_out)
    assert pred_b.shape == (Bb, O)
    assert jnp.allclose(pred_b, ref_b, atol=1e-4, rtol=1e-4)

    print("KERNEL_OK")
</pallas_src>

<mosaic_0001>
module attributes {stable_mosaic.version = 11 : i64} {
  func.func @_attn_unit_kernel(%arg0: i32, %arg1: memref<2x8x8x32xf32, #tpu.memory_space<vmem>>, %arg2: memref<8x32xf32, #tpu.memory_space<vmem>>, %arg3: memref<3x32x32xf32, #tpu.memory_space<vmem>>, %arg4: memref<32x128xf32, #tpu.memory_space<vmem>>, %arg5: memref<2x128xf32, #tpu.memory_space<vmem>>, %arg6: memref<8x128xf32, #tpu.memory_space<vmem>>) attributes {dimension_semantics = [#tpu.dimension_semantics<parallel>], iteration_bounds = array<i64: 1>, scalar_prefetch = 0 : i64, scratch_operands = 0 : i64, tpu.core_type = #tpu.core_type<tc>, window_params = [{transform_indices = @transform_0, window_bounds = array<i64: 2, 8, 8, 32>}, {transform_indices = @transform_1, window_bounds = array<i64: 8, 32>}, {pipeline_mode = #tpu.pipeline_mode<synchronous>, transform_indices = @transform_2, window_bounds = array<i64: 3, 32, 32>}, {pipeline_mode = #tpu.pipeline_mode<synchronous>, transform_indices = @transform_3, window_bounds = array<i64: 32, 128>}, {pipeline_mode = #tpu.pipeline_mode<synchronous>, transform_indices = @transform_4, window_bounds = array<i64: 2, 128>}, {transform_indices = @transform_5, window_bounds = array<i64: 8, 128>}]} {
    %c0 = arith.constant 0 : index
    %c0_0 = arith.constant 0 : index
    %c0_1 = arith.constant 0 : index
    %c0_2 = arith.constant 0 : index
    %0 = vector.load %arg1[%c0, %c0_0, %c0_1, %c0_2] : memref<2x8x8x32xf32, #tpu.memory_space<vmem>>, vector<2x8x8x32xf32>
    %c0_3 = arith.constant 0 : index
    %c0_4 = arith.constant 0 : index
    %1 = vector.load %arg2[%c0_3, %c0_4] : memref<8x32xf32, #tpu.memory_space<vmem>>, vector<8x32xf32>
    %2 = vector.shape_cast %1 : vector<8x32xf32> to vector<1x8x1x32xf32>
    %3 = vector.broadcast %2 : vector<1x8x1x32xf32> to vector<2x8x8x32xf32>
    %4 = arith.mulf %0, %3 : vector<2x8x8x32xf32>
    %cst = arith.constant dense<0.000000e+00> : vector<2x8x8xf32>
    %5 = vector.multi_reduction <add>, %4, %cst [3] : vector<2x8x8x32xf32> to vector<2x8x8xf32>
    %cst_5 = arith.constant dense<0xFF800000> : vector<2x8xf32>
    %6 = vector.multi_reduction <maximumf>, %5, %cst_5 [2] : vector<2x8x8xf32> to vector<2x8xf32>
    %7 = vector.shape_cast %6 : vector<2x8xf32> to vector<2x8x1xf32>
    %8 = vector.broadcast %7 : vector<2x8x1xf32> to vector<2x8x8xf32>
    %9 = arith.subf %5, %8 : vector<2x8x8xf32>
    %10 = math.exp %9 : vector<2x8x8xf32>
    %cst_6 = arith.constant dense<0.000000e+00> : vector<2x8xf32>
    %11 = vector.multi_reduction <add>, %10, %cst_6 [2] : vector<2x8x8xf32> to vector<2x8xf32>
    %12 = vector.shape_cast %11 : vector<2x8xf32> to vector<2x8x1xf32>
    %13 = vector.broadcast %12 : vector<2x8x1xf32> to vector<2x8x8xf32>
    %14 = arith.divf %10, %13 : vector<2x8x8xf32>
    %15 = vector.shape_cast %14 : vector<2x8x8xf32> to vector<2x8x8x1xf32>
    %16 = vector.broadcast %15 : vector<2x8x8x1xf32> to vector<2x8x8x32xf32>
    %17 = arith.mulf %0, %16 : vector<2x8x8x32xf32>
    %cst_7 = arith.constant dense<0.000000e+00> : vector<2x8x32xf32>
    %18 = vector.multi_reduction <add>, %17, %cst_7 [2] : vector<2x8x8x32xf32> to vector<2x8x32xf32>
    %c0_8 = arith.constant 0 : index
    %c0_9 = arith.constant 0 : index
    %19 = vector.load %arg5[%c0_8, %c0_9] : memref<2x128xf32, #tpu.memory_space<vmem>>, vector<2x128xf32>
    %20 = vector.extract_strided_slice %19 {offsets = [0, 0], sizes = [1, 32], strides = [1, 1]} : vector<2x128xf32> to vector<1x32xf32>
    %21 = vector.extract_strided_slice %19 {offsets = [1, 0], sizes = [1, 128], strides = [1, 1]} : vector<2x128xf32> to vector<1x128xf32>
    %22 = vector.extract_strided_slice %18 {offsets = [0, 0, 0], sizes = [1, 8, 32], strides = [1, 1, 1]} : vector<2x8x32xf32> to vector<1x8x32xf32>
    %23 = vector.shape_cast %22 : vector<1x8x32xf32> to vector<8x32xf32>
    %c0_10 = arith.constant 0 : index
    %c0_11 = arith.constant 0 : index
    %c0_12 = arith.constant 0 : index
    %24 = vector.load %arg3[%c0_10, %c0_11, %c0_12] : memref<3x32x32xf32, #tpu.memory_space<vmem>>, vector<1x32x32xf32>
    %25 = vector.shape_cast %24 : vector<1x32x32xf32> to vector<32x32xf32>
    %cst_13 = arith.constant dense<0.000000e+00> : vector<8x32xf32>
    %26 = tpu.matmul %23, %25, %cst_13 {dimension_numbers = #tpu.dot_dimension_numbers<[1], [0], [0], [1], [0, 0, 1, 1], [], []>} : vector<8x32xf32>, vector<32x32xf32>, vector<8x32xf32> -> vector<8x32xf32>
    %27 = vector.extract_strided_slice %18 {offsets = [1, 0, 0], sizes = [1, 8, 32], strides = [1, 1, 1]} : vector<2x8x32xf32> to vector<1x8x32xf32>
    %28 = vector.shape_cast %27 : vector<1x8x32xf32> to vector<8x32xf32>
    %c1 = arith.constant 1 : index
    %c0_14 = arith.constant 0 : index
    %c0_15 = arith.constant 0 : index
    %29 = vector.load %arg3[%c1, %c0_14, %c0_15] : memref<3x32x32xf32, #tpu.memory_space<vmem>>, vector<1x32x32xf32>
    %30 = vector.shape_cast %29 : vector<1x32x32xf32> to vector<32x32xf32>
    %cst_16 = arith.constant dense<0.000000e+00> : vector<8x32xf32>
    %31 = tpu.matmul %28, %30, %cst_16 {dimension_numbers = #tpu.dot_dimension_numbers<[1], [0], [0], [1], [0, 0, 1, 1], [], []>} : vector<8x32xf32>, vector<32x32xf32>, vector<8x32xf32> -> vector<8x32xf32>
    %32 = arith.addf %26, %31 : vector<8x32xf32>
    %c2 = arith.constant 2 : index
    %c0_17 = arith.constant 0 : index
    %c0_18 = arith.constant 0 : index
    %33 = vector.load %arg3[%c2, %c0_17, %c0_18] : memref<3x32x32xf32, #tpu.memory_space<vmem>>, vector<1x32x32xf32>
    %34 = vector.shape_cast %33 : vector<1x32x32xf32> to vector<32x32xf32>
    %cst_19 = arith.constant dense<0.000000e+00> : vector<8x32xf32>
    %35 = tpu.matmul %1, %34, %cst_19 {dimension_numbers = #tpu.dot_dimension_numbers<[1], [0], [0], [1], [0, 0, 1, 1], [], []>} : vector<8x32xf32>, vector<32x32xf32>, vector<8x32xf32> -> vector<8x32xf32>
    %36 = arith.addf %32, %35 : vector<8x32xf32>
    %37 = vector.broadcast %20 : vector<1x32xf32> to vector<8x32xf32>
    %38 = arith.addf %36, %37 : vector<8x32xf32>
    %39 = math.tanh %38 : vector<8x32xf32>
    %c0_20 = arith.constant 0 : index
    %c0_21 = arith.constant 0 : index
    %40 = vector.load %arg4[%c0_20, %c0_21] : memref<32x128xf32, #tpu.memory_space<vmem>>, vector<32x128xf32>
    %cst_22 = arith.constant dense<0.000000e+00> : vector<8x128xf32>
    %41 = tpu.matmul %39, %40, %cst_22 {dimension_numbers = #tpu.dot_dimension_numbers<[1], [0], [0], [1], [0, 0, 1, 1], [], []>} : vector<8x32xf32>, vector<32x128xf32>, vector<8x128xf32> -> vector<8x128xf32>
    %42 = vector.broadcast %21 : vector<1x128xf32> to vector<8x128xf32>
    %43 = arith.addf %41, %42 : vector<8x128xf32>
    %cst_23 = arith.constant dense<0xFF800000> : vector<8xf32>
    %44 = vector.multi_reduction <maximumf>, %43, %cst_23 [1] : vector<8x128xf32> to vector<8xf32>
    %45 = vector.shape_cast %44 : vector<8xf32> to vector<8x1xf32>
    %46 = vector.broadcast %45 : vector<8x1xf32> to vector<8x128xf32>
    %47 = arith.subf %43, %46 : vector<8x128xf32>
    %48 = math.exp %47 : vector<8x128xf32>
    %cst_24 = arith.constant dense<0.000000e+00> : vector<8xf32>
    %49 = vector.multi_reduction <add>, %48, %cst_24 [1] : vector<8x128xf32> to vector<8xf32>
    %50 = vector.shape_cast %49 : vector<8xf32> to vector<8x1xf32>
    %51 = math.log %50 : vector<8x1xf32>
    %52 = vector.broadcast %51 : vector<8x1xf32> to vector<8x128xf32>
    %53 = arith.subf %47, %52 : vector<8x128xf32>
    %c0_25 = arith.constant 0 : index
    %c0_26 = arith.constant 0 : index
    %54 = vector.load %arg6[%c0_25, %c0_26] : memref<8x128xf32, #tpu.memory_space<vmem>>, vector<8x128xf32>
    tpu.vector_store %arg6[%c0_25, %c0_26], %53 {strides = array<i32>} : memref<8x128xf32, #tpu.memory_space<vmem>>, vector<8x128xf32>,
    return
  }
  func.func @transform_0(%arg0: i32) -> (i32, i32, i32, i32) {
    %c0_i32 = arith.constant 0 : i32
    %c0_i32_0 = arith.constant 0 : i32
    %c0_i32_1 = arith.constant 0 : i32
    %c0_i32_2 = arith.constant 0 : i32
    return %c0_i32, %arg0, %c0_i32_0, %c0_i32_1 : i32, i32, i32, i32
  }
  func.func @transform_1(%arg0: i32) -> (i32, i32) {
    %c0_i32 = arith.constant 0 : i32
    %c0_i32_0 = arith.constant 0 : i32
    return %arg0, %c0_i32 : i32, i32
  }
  func.func @transform_2(%arg0: i32) -> (i32, i32, i32) {
    %c0_i32 = arith.constant 0 : i32
    %c0_i32_0 = arith.constant 0 : i32
    %c0_i32_1 = arith.constant 0 : i32
    %c0_i32_2 = arith.constant 0 : i32
    return %c0_i32, %c0_i32_0, %c0_i32_1 : i32, i32, i32
  }
  func.func @transform_3(%arg0: i32) -> (i32, i32) {
    %c0_i32 = arith.constant 0 : i32
    %c0_i32_0 = arith.constant 0 : i32
    %c0_i32_1 = arith.constant 0 : i32
    return %c0_i32, %c0_i32_0 : i32, i32
  }
  func.func @transform_4(%arg0: i32) -> (i32, i32) {
    %c0_i32 = arith.constant 0 : i32
    %c0_i32_0 = arith.constant 0 : i32
    %c0_i32_1 = arith.constant 0 : i32
    return %c0_i32, %c0_i32_0 : i32, i32
  }
  func.func @transform_5(%arg0: i32) -> (i32, i32) {
    %c0_i32 = arith.constant 0 : i32
    %c0_i32_0 = arith.constant 0 : i32
    return %arg0, %c0_i32 : i32, i32
  }
}

</mosaic_0001>

<llo_original>
// kernel: tpu_custom_call.1
$region0: #{tpu_custom_call.1}
  #allocation0 [shape = 'u32[]', space=smem, size = 0x4, offset = 0x4, fixed_abs, tag = 'smem constant byte address 0x4 - core index']
  #allocation1 [shape = 'u32[144,128]{1,0:T(1,128)}', space=vmem, size = 0x12000, scoped, tag = 'internal scratch']
  %s0 = inlined_call_operand.hbm [shape: f32[2,8,8,32], index: 0, kind: input, shape index: {}]
  %s1 = inlined_call_operand.hbm [shape: f32[8,32], index: 1, kind: input, shape index: {}]
  %s2 = inlined_call_operand.hbm [shape: f32[3,32,32], index: 2, kind: input, shape index: {}]
  %s3 = inlined_call_operand.hbm [shape: f32[32,128], index: 3, kind: input, shape index: {}]
  %s4 = inlined_call_operand.vmem [shape: f32[2,128], index: 4, kind: input, shape index: {}]
  %s5 = inlined_call_operand.hbm [shape: f32[8,128], index: 5, kind: output, shape index: {}]
  %s6 = sld [smem:[#allocation0]]
  $region46: #{tpu_custom_call.1} parent=0
    _
  %s8 = ssub.s32 1, %s6
  %s9 = scalar_select 0, %s8, %s6
  $region1: #{tpu_custom_call.1} parent=0
    #allocation2 [shape = 'u8[65536]{0}', space=vmem, size = 0x10000, scoped, tag = 'input window, operand 0, single buffered']
    #allocation3 [shape = 's32[1]{0}', space=sflag, size = 0x4, scoped, tag = 'scoped memory for tpu_custom_call.1']
    #allocation4 [shape = 's32[1]{0}', space=sflag, size = 0x4, scoped, tag = 'scoped memory for tpu_custom_call.1']
    #allocation5 [shape = 'u8[4096]{0}', space=vmem, size = 0x1000, scoped, tag = 'input window, operand 1, single buffered']
    #allocation6 [shape = 's32[1]{0}', space=sflag, size = 0x4, scoped, tag = 'scoped memory for tpu_custom_call.1']
    #allocation7 [shape = 'u8[49152]{0}', space=vmem, size = 0xc000, scoped, tag = 'input window, operand 2, single buffered']
    #allocation8 [shape = 'u8[16384]{0}', space=vmem, size = 0x4000, scoped, tag = 'input window, operand 3, single buffered']
    #allocation9 [shape = 's32[1]{0}', space=sflag, size = 0x4, scoped, tag = 'scoped memory for tpu_custom_call.1']
    #allocation10 [shape = 'u8[4096]{0}', space=vmem, size = 0x1000, scoped, tag = 'output window, operand 0, single buffered']
    %10 = vsyncpa [#allocation3], 0
    %11 = vsyncpa [#allocation6], 0
    %12 = vsyncpa [#allocation9], 0
    %13 = vsyncpa [#allocation4], 0
    // Predicated region
    $region2: #{tpu_custom_call.1} parent=1 // pred_check
      _
    $region3: #{tpu_custom_call.1} parent=1 // pred_check_branch
      %15 = sbr.rel (0) target = $region5
    $region4: #{tpu_custom_call.1} parent=1 // pred_region
      %s17 = ssub.s32 2048, 2048
      %18 = vsyncadd [#allocation3], %s17
      %s19 = sshll.u32 [#allocation2], 4
      %s20 = int_to_ptr.vmem [resolvable:$true] %s19
      %25 = dma.hbm_to_vmem [thread:$0]  %s0, 2048, %s20, [#allocation3], 128, 128, 8
    $region5: #{tpu_custom_call.1} parent=1 // pred_fallthru
      _
    // Predicated region
    $region6: #{tpu_custom_call.1} parent=1 // pred_check
      _
    $region7: #{tpu_custom_call.1} parent=1 // pred_check_branch
      %27 = sbr.rel (0) target = $region9
    $region8: #{tpu_custom_call.1} parent=1 // pred_region
      %s29 = ssub.s32 128, 128
      %30 = vsyncadd [#allocation6], %s29
      %s32 = sshll.u32 [#allocation5], 4
      %s33 = int_to_ptr.vmem [resolvable:$true] %s32
      %35 = dma.hbm_to_vmem [thread:$0]  %s1, 128, %s33, [#allocation6]
    $region9: #{tpu_custom_call.1} parent=1 // pred_fallthru
      _
    // Predicated region
    $region10: #{tpu_custom_call.1} parent=1 // pred_check
      _
    $region11: #{tpu_custom_call.1} parent=1 // pred_check_branch
      %37 = sbr.rel (0) target = $region13
    $region12: #{tpu_custom_call.1} parent=1 // pred_region
      %s39 = ssub.s32 1536, 1536
      %40 = vsyncadd [#allocation6], %s39
      %s41 = sshll.u32 [#allocation7], 4
      %s42 = int_to_ptr.vmem [resolvable:$true] %s41
      %47 = dma.hbm_to_vmem [thread:$0]  %s2, 1536, %s42, [#allocation6], 128, 128, 8
    $region13: #{tpu_custom_call.1} parent=1 // pred_fallthru
      _
    // Predicated region
    $region14: #{tpu_custom_call.1} parent=1 // pred_check
      _
    $region15: #{tpu_custom_call.1} parent=1 // pred_check_branch
      %49 = sbr.rel (0) target = $region17
    $region16: #{tpu_custom_call.1} parent=1 // pred_region
      %s51 = ssub.s32 512, 512
      %52 = vsyncadd [#allocation9], %s51
      %s53 = sshll.u32 [#allocation8], 4
      %s54 = int_to_ptr.vmem [resolvable:$true] %s53
      %59 = dma.hbm_to_vmem [thread:$0]  %s3, 512, %s54, [#allocation9], 128, 128, 8
    $region17: #{tpu_custom_call.1} parent=1 // pred_fallthru
      _
    // Predicated region
    $region18: #{tpu_custom_call.1} parent=1 // pred_check
      _
    $region19: #{tpu_custom_call.1} parent=1 // pred_check_branch
      %61 = sbr.rel (0) target = $region21
    $region20: #{tpu_custom_call.1} parent=1 // pred_region
      _
    $region21: #{tpu_custom_call.1} parent=1 // pred_fallthru
      _
    // Predicated region
    $region22: #{tpu_custom_call.1} parent=1 // pred_check
      _
    $region23: #{tpu_custom_call.1} parent=1 // pred_check_branch
      %63 = sbr.rel (0) target = $region25
    $region24: #{tpu_custom_call.1} parent=1 // pred_region
      %64 = dma.done [#allocation3], 2048
    $region25: #{tpu_custom_call.1} parent=1 // pred_fallthru
      _
    // Predicated region
    $region26: #{tpu_custom_call.1} parent=1 // pred_check
      _
    $region27: #{tpu_custom_call.1} parent=1 // pred_check_branch
      %66 = sbr.rel (0) target = $region29
    $region28: #{tpu_custom_call.1} parent=1 // pred_region
      %67 = dma.done [#allocation6], 128
    $region29: #{tpu_custom_call.1} parent=1 // pred_fallthru
      _
    // Predicated region
    $region30: #{tpu_custom_call.1} parent=1 // pred_check
      _
    $region31: #{tpu_custom_call.1} parent=1 // pred_check_branch
      %69 = sbr.rel (0) target = $region33
    $region32: #{tpu_custom_call.1} parent=1 // pred_region
      %70 = dma.done [#allocation6], 1536
    $region33: #{tpu_custom_call.1} parent=1 // pred_fallthru
      _
    // Predicated region
    $region34: #{tpu_custom_call.1} parent=1 // pred_check
      _
    $region35: #{tpu_custom_call.1} parent=1 // pred_check_branch
      %72 = sbr.rel (0) target = $region37
    $region36: #{tpu_custom_call.1} parent=1 // pred_region
      %73 = dma.done [#allocation9], 512
    $region37: #{tpu_custom_call.1} parent=1 // pred_fallthru
      _
    %v74 = vld [vmem:[#allocation2] sm:$0xff]
    %v75 = vld [vmem:[#allocation2 + $0x8] sm:$0xff]
    %v76 = vld [vmem:[#allocation2 + $0x10] sm:$0xff]
    %v77 = vld [vmem:[#allocation2 + $0x18] sm:$0xff]
    %v78 = vld [vmem:[#allocation2 + $0x20] sm:$0xff]
    %v79 = vld [vmem:[#allocation2 + $0x28] sm:$0xff]
    %v80 = vld [vmem:[#allocation2 + $0x30] sm:$0xff]
    %v81 = vld [vmem:[#allocation2 + $0x38] sm:$0xff]
    %v82 = vld [vmem:[#allocation2 + $0x40] sm:$0xff]
    %v83 = vld [vmem:[#allocation2 + $0x48] sm:$0xff]
    %v84 = vld [vmem:[#allocation2 + $0x50] sm:$0xff]
    %v85 = vld [vmem:[#allocation2 + $0x58] sm:$0xff]
    %v86 = vld [vmem:[#allocation2 + $0x60] sm:$0xff]
    %v87 = vld [vmem:[#allocation2 + $0x68] sm:$0xff]
    %v88 = vld [vmem:[#allocation2 + $0x70] sm:$0xff]
    %v89 = vld [vmem:[#allocation2 + $0x78] sm:$0xff]
    %v90 = vld [vmem:[#allocation5] sm:$0xff]
    %v92 = vcombine.high %v90, %v90
    %v94 = vunpack.c.l.s4 1966171168
    %v95 = vunpack.c.0.s8 %v94
    %v96 = vlaneseq
    %v97 = vshrl.u32 %v96, 7
    %v98 = vsub.s32 %v95, %v97
    %v99 = vrot.slane %v90, %v98
    %v101 = vunpack.c.l.s4 1966171168
    %v102 = vunpack.c.0.s8 %v101
    %v103 = vlaneseq
    %v104 = vshrl.u32 %v103, 7
    %v105 = vsub.s32 %v102, %v104
    %v106 = vrot.slane %v92, %v105
    %v107 = vcombine.high %v99, %v99
    %v108 = vcombine.high %v106, %v106
    %v110 = vunpack.c.l.s4 1966171168
    %v111 = vunpack.c.0.s8 %v110
    %v112 = vlaneseq
    %v113 = vshrl.u32 %v112, 7
    %v114 = vsub.s32 %v111, %v113
    %v115 = vrot.slane %v99, %v114
    %v117 = vunpack.c.l.s4 1966171168
    %v118 = vunpack.c.0.s8 %v117
    %v119 = vlaneseq
    %v120 = vshrl.u32 %v119, 7
    %v121 = vsub.s32 %v118, %v120
    %v122 = vrot.slane %v106, %v121
    %v124 = vunpack.c.l.s4 1966171168
    %v125 = vunpack.c.0.s8 %v124
    %v126 = vlaneseq
    %v127 = vshrl.u32 %v126, 7
    %v128 = vsub.s32 %v125, %v127
    %v129 = vrot.slane %v107, %v128
    %v131 = vunpack.c.l.s4 1966171168
    %v132 = vunpack.c.0.s8 %v131
    %v133 = vlaneseq
    %v134 = vshrl.u32 %v133, 7
    %v135 = vsub.s32 %v132, %v134
    %v136 = vrot.slane %v108, %v135
    %v137 = vcombine.high %v115, %v115
    %v138 = vcombine.high %v122, %v122
    %v139 = vcombine.high %v129, %v129
    %v140 = vcombine.high %v136, %v136
    %v141 = vlaneseq
    %v142 = vshrl.u32 %v141, 7
    %v143 = vsub.s32 0, %v142
    %v144 = vrot.slane %v115, %v143
    %v145 = vlaneseq
    %v146 = vshrl.u32 %v145, 7
    %v147 = vsub.s32 0, %v146
    %v148 = vrot.slane %v129, %v147
    %v149 = vlaneseq
    %v150 = vshrl.u32 %v149, 7
    %v151 = vsub.s32 0, %v150
    %v152 = vrot.slane %v137, %v151
    %v153 = vlaneseq
    %v154 = vshrl.u32 %v153, 7
    %v155 = vsub.s32 0, %v154
    %v156 = vrot.slane %v139, %v155
    %v157 = vlaneseq
    %v158 = vshrl.u32 %v157, 7
    %v159 = vsub.s32 0, %v158
    %v160 = vrot.slane %v122, %v159
    %v161 = vlaneseq
    %v162 = vshrl.u32 %v161, 7
    %v163 = vsub.s32 0, %v162
    %v164 = vrot.slane %v136, %v163
    %v165 = vlaneseq
    %v166 = vshrl.u32 %v165, 7
    %v167 = vsub.s32 0, %v166
    %v168 = vrot.slane %v138, %v167
    %v169 = vlaneseq
    %v170 = vshrl.u32 %v169, 7
    %v171 = vsub.s32 0, %v170
    %v172 = vrot.slane %v140, %v171
    %v181 = vmul.f32 %v74, %v144
    %v182 = vmul.f32 %v75, %v148
    %v183 = vmul.f32 %v76, %v152
    %v184 = vmul.f32 %v77, %v156
    %v185 = vmul.f32 %v78, %v160
    %v186 = vmul.f32 %v79, %v164
    %v187 = vmul.f32 %v80, %v168
    %v188 = vmul.f32 %v81, %v172
    %v189 = vmul.f32 %v82, %v144
    %v190 = vmul.f32 %v83, %v148
    %v191 = vmul.f32 %v84, %v152
    %v192 = vmul.f32 %v85, %v156
    %v193 = vmul.f32 %v86, %v160
    %v194 = vmul.f32 %v87, %v164
    %v195 = vmul.f32 %v88, %v168
    %v196 = vmul.f32 %v89, %v172
    %vm197 = vcmask 261120
    %v198 = vsel %vm197, %v181, 0.0
    %199 = vadd.xlane.f32.xlu0 %v198
    %v200 = vpop.xlane.xlu0 %199
    %v201 = vsel %vm197, %v182, 0.0
    %202 = vadd.xlane.f32.xlu0 %v201
    %v203 = vpop.xlane.xlu0 %202
    %v204 = vsel %vm197, %v183, 0.0
    %205 = vadd.xlane.f32.xlu0 %v204
    %v206 = vpop.xlane.xlu0 %205
    %v207 = vsel %vm197, %v184, 0.0
    %208 = vadd.xlane.f32.xlu0 %v207
    %v209 = vpop.xlane.xlu0 %208
    %v210 = vsel %vm197, %v185, 0.0
    %211 = vadd.xlane.f32.xlu0 %v210
    %v212 = vpop.xlane.xlu0 %211
    %v213 = vsel %vm197, %v186, 0.0
    %214 = vadd.xlane.f32.xlu0 %v213
    %v215 = vpop.xlane.xlu0 %214
    %v216 = vsel %vm197, %v187, 0.0
    %217 = vadd.xlane.f32.xlu0 %v216
    %v218 = vpop.xlane.xlu0 %217
    %v219 = vsel %vm197, %v188, 0.0
    %220 = vadd.xlane.f32.xlu0 %v219
    %v221 = vpop.xlane.xlu0 %220
    %v222 = vsel %vm197, %v189, 0.0
    %223 = vadd.xlane.f32.xlu0 %v222
    %v224 = vpop.xlane.xlu0 %223
    %v225 = vsel %vm197, %v190, 0.0
    %226 = vadd.xlane.f32.xlu0 %v225
    %v227 = vpop.xlane.xlu0 %226
    %v228 = vsel %vm197, %v191, 0.0
    %229 = vadd.xlane.f32.xlu0 %v228
    %v230 = vpop.xlane.xlu0 %229
    %v231 = vsel %vm197, %v192, 0.0
    %232 = vadd.xlane.f32.xlu0 %v231
    %v233 = vpop.xlane.xlu0 %232
    %v234 = vsel %vm197, %v193, 0.0
    %235 = vadd.xlane.f32.xlu0 %v234
    %v236 = vpop.xlane.xlu0 %235
    %v237 = vsel %vm197, %v194, 0.0
    %238 = vadd.xlane.f32.xlu0 %v237
    %v239 = vpop.xlane.xlu0 %238
    %v240 = vsel %vm197, %v195, 0.0
    %241 = vadd.xlane.f32.xlu0 %v240
    %v242 = vpop.xlane.xlu0 %241
    %v243 = vsel %vm197, %v196, 0.0
    %244 = vadd.xlane.f32.xlu0 %v243
    %v245 = vpop.xlane.xlu0 %244
    %v262 = vlaneseq
    %v263 = vand.u32 %v262, 127
    %v264 = vlaneseq
    %v265 = vshrl.u32 %v264, 7
    %v266 = vsub.s32 %v263, %v265
    %v267 = vrot.slane %v200, %v266
    %v268 = vlaneseq
    %v269 = vshrl.u32 %v268, 7
    %v270 = vsub.s32 %v263, %v269
    %v271 = vrot.slane %v203, %v270
    %v272 = vlaneseq
    %v273 = vshrl.u32 %v272, 7
    %v274 = vsub.s32 %v263, %v273
    %v275 = vrot.slane %v206, %v274
    %v276 = vlaneseq
    %v277 = vshrl.u32 %v276, 7
    %v278 = vsub.s32 %v263, %v277
    %v279 = vrot.slane %v209, %v278
    %v280 = vlaneseq
    %v281 = vshrl.u32 %v280, 7
    %v282 = vsub.s32 %v263, %v281
    %v283 = vrot.slane %v212, %v282
    %v284 = vlaneseq
    %v285 = vshrl.u32 %v284, 7
    %v286 = vsub.s32 %v263, %v285
    %v287 = vrot.slane %v215, %v286
    %v288 = vlaneseq
    %v289 = vshrl.u32 %v288, 7
    %v290 = vsub.s32 %v263, %v289
    %v291 = vrot.slane %v218, %v290
    %v292 = vlaneseq
    %v293 = vshrl.u32 %v292, 7
    %v294 = vsub.s32 %v263, %v293
    %v295 = vrot.slane %v221, %v294
    %v296 = vlaneseq
    %v297 = vshrl.u32 %v296, 7
    %v298 = vsub.s32 %v263, %v297
    %v299 = vrot.slane %v224, %v298
    %v300 = vlaneseq
    %v301 = vshrl.u32 %v300, 7
    %v302 = vsub.s32 %v263, %v301
    %v303 = vrot.slane %v227, %v302
    %v304 = vlaneseq
    %v305 = vshrl.u32 %v304, 7
    %v306 = vsub.s32 %v263, %v305
    %v307 = vrot.slane %v230, %v306
    %v308 = vlaneseq
    %v309 = vshrl.u32 %v308, 7
    %v310 = vsub.s32 %v263, %v309
    %v311 = vrot.slane %v233, %v310
    %v312 = vlaneseq
    %v313 = vshrl.u32 %v312, 7
    %v314 = vsub.s32 %v263, %v313
    %v315 = vrot.slane %v236, %v314
    %v316 = vlaneseq
    %v317 = vshrl.u32 %v316, 7
    %v318 = vsub.s32 %v263, %v317
    %v319 = vrot.slane %v239, %v318
    %v320 = vlaneseq
    %v321 = vshrl.u32 %v320, 7
    %v322 = vsub.s32 %v263, %v321
    %v323 = vrot.slane %v242, %v322
    %v324 = vlaneseq
    %v325 = vshrl.u32 %v324, 7
    %v326 = vsub.s32 %v263, %v325
    %v327 = vrot.slane %v245, %v326
    %vm328 = vcmask 1041409
    %v329 = vsel %vm328, %v271, %v267
    %vm330 = vcmask 1042434
    %v331 = vsel %vm330, %v275, %v329
    %vm332 = vcmask 1043459
    %v333 = vsel %vm332, %v279, %v331
    %vm334 = vcmask 1044484
    %v335 = vsel %vm334, %v283, %v333
    %vm336 = vcmask 1045509
    %v337 = vsel %vm336, %v287, %v335
    %vm338 = vcmask 1046534
    %v339 = vsel %vm338, %v291, %v337
    %vm340 = vcmask 1047559
    %v341 = vsel %vm340, %v295, %v339
    %v342 = vsel %vm328, %v303, %v299
    %v343 = vsel %vm330, %v307, %v342
    %v344 = vsel %vm332, %v311, %v343
    %v345 = vsel %vm334, %v315, %v344
    %v346 = vsel %vm336, %v319, %v345
    %v347 = vsel %vm338, %v323, %v346
    %v348 = vsel %vm340, %v327, %v347
    %vm351 = vcmask 64512
    %v352 = vsel %vm351, %v341, -inf
    %353 = vmax.xlane.f32.xlu0 %v352
    %v354 = vpop.xlane.xlu0 %353
    %v355 = vsel %vm351, %v348, -inf
    %356 = vmax.xlane.f32.xlu0 %v355
    %v357 = vpop.xlane.xlu0 %356
    %v360 = vlaneseq
    %v361 = vshrl.u32 %v360, 7
    %v362 = vsub.s32 0, %v361
    %v363 = vrot.slane %v354, %v362
    %v364 = vlaneseq
    %v365 = vshrl.u32 %v364, 7
    %v366 = vsub.s32 1, %v365
    %v367 = vrot.slane %v354, %v366
    %v368 = vlaneseq
    %v369 = vshrl.u32 %v368, 7
    %v370 = vsub.s32 2, %v369
    %v371 = vrot.slane %v354, %v370
    %v372 = vlaneseq
    %v373 = vshrl.u32 %v372, 7
    %v374 = vsub.s32 3, %v373
    %v375 = vrot.slane %v354, %v374
    %v376 = vlaneseq
    %v377 = vshrl.u32 %v376, 7
    %v378 = vsub.s32 4, %v377
    %v379 = vrot.slane %v354, %v378
    %v380 = vlaneseq
    %v381 = vshrl.u32 %v380, 7
    %v382 = vsub.s32 5, %v381
    %v383 = vrot.slane %v354, %v382
    %v384 = vlaneseq
    %v385 = vshrl.u32 %v384, 7
    %v386 = vsub.s32 6, %v385
    %v387 = vrot.slane %v354, %v386
    %v388 = vlaneseq
    %v389 = vshrl.u32 %v388, 7
    %v390 = vsub.s32 7, %v389
    %v391 = vrot.slane %v354, %v390
    %v392 = vlaneseq
    %v393 = vshrl.u32 %v392, 7
    %v394 = vsub.s32 0, %v393
    %v395 = vrot.slane %v357, %v394
    %v396 = vlaneseq
    %v397 = vshrl.u32 %v396, 7
    %v398 = vsub.s32 1, %v397
    %v399 = vrot.slane %v357, %v398
    %v400 = vlaneseq
    %v401 = vshrl.u32 %v400, 7
    %v402 = vsub.s32 2, %v401
    %v403 = vrot.slane %v357, %v402
    %v404 = vlaneseq
    %v405 = vshrl.u32 %v404, 7
    %v406 = vsub.s32 3, %v405
    %v407 = vrot.slane %v357, %v406
    %v408 = vlaneseq
    %v409 = vshrl.u32 %v408, 7
    %v410 = vsub.s32 4, %v409
    %v411 = vrot.slane %v357, %v410
    %v412 = vlaneseq
    %v413 = vshrl.u32 %v412, 7
    %v414 = vsub.s32 5, %v413
    %v415 = vrot.slane %v357, %v414
    %v416 = vlaneseq
    %v417 = vshrl.u32 %v416, 7
    %v418 = vsub.s32 6, %v417
    %v419 = vrot.slane %v357, %v418
    %v420 = vlaneseq
    %v421 = vshrl.u32 %v420, 7
    %v422 = vsub.s32 7, %v421
    %v423 = vrot.slane %v357, %v422
    %v440 = vsub.f32 %v200, %v363
    %v441 = vsub.f32 %v203, %v367
    %v442 = vsub.f32 %v206, %v371
    %v443 = vsub.f32 %v209, %v375
    %v444 = vsub.f32 %v212, %v379
    %v445 = vsub.f32 %v215, %v383
    %v446 = vsub.f32 %v218, %v387
    %v447 = vsub.f32 %v221, %v391
    %v448 = vsub.f32 %v224, %v395
    %v449 = vsub.f32 %v227, %v399
    %v450 = vsub.f32 %v230, %v403
    %v451 = vsub.f32 %v233, %v407
    %v452 = vsub.f32 %v236, %v411
    %v453 = vsub.f32 %v239, %v415
    %v454 = vsub.f32 %v242, %v419
    %v455 = vsub.f32 %v245, %v423
    %v456 = vmul.f32 %v440, 1.442695
    %v457 = vpow.pop %v456
    %v458 = vmul.f32 %v441, 1.442695
    %v459 = vpow.pop %v458
    %v460 = vmul.f32 %v442, 1.442695
    %v461 = vpow.pop %v460
    %v462 = vmul.f32 %v443, 1.442695
    %v463 = vpow.pop %v462
    %v464 = vmul.f32 %v444, 1.442695
    %v465 = vpow.pop %v464
    %v466 = vmul.f32 %v445, 1.442695
    %v467 = vpow.pop %v466
    %v468 = vmul.f32 %v446, 1.442695
    %v469 = vpow.pop %v468
    %v470 = vmul.f32 %v447, 1.442695
    %v471 = vpow.pop %v470
    %v472 = vmul.f32 %v448, 1.442695
    %v473 = vpow.pop %v472
    %v474 = vmul.f32 %v449, 1.442695
    %v475 = vpow.pop %v474
    %v476 = vmul.f32 %v450, 1.442695
    %v477 = vpow.pop %v476
    %v478 = vmul.f32 %v451, 1.442695
    %v479 = vpow.pop %v478
    %v480 = vmul.f32 %v452, 1.442695
    %v481 = vpow.pop %v480
    %v482 = vmul.f32 %v453, 1.442695
    %v483 = vpow.pop %v482
    %v484 = vmul.f32 %v454, 1.442695
    %v485 = vpow.pop %v484
    %v486 = vmul.f32 %v455, 1.442695
    %v487 = vpow.pop %v486
    %504 = vset.pattern.permute.xlu0 0
    %505 = vperm.xlu0 %504, %v457
    %v506 = vpop.permute.xlu0 %505
    %507 = vset.pattern.permute.xlu0 0
    %508 = vperm.xlu0 %507, %v459
    %v509 = vpop.permute.xlu0 %508
    %510 = vset.pattern.permute.xlu0 0
    %511 = vperm.xlu0 %510, %v461
    %v512 = vpop.permute.xlu0 %511
    %513 = vset.pattern.permute.xlu0 0
    %514 = vperm.xlu0 %513, %v463
    %v515 = vpop.permute.xlu0 %514
    %516 = vset.pattern.permute.xlu0 0
    %517 = vperm.xlu0 %516, %v465
    %v518 = vpop.permute.xlu0 %517
    %519 = vset.pattern.permute.xlu0 0
    %520 = vperm.xlu0 %519, %v467
    %v521 = vpop.permute.xlu0 %520
    %522 = vset.pattern.permute.xlu0 0
    %523 = vperm.xlu0 %522, %v469
    %v524 = vpop.permute.xlu0 %523
    %525 = vset.pattern.permute.xlu0 0
    %526 = vperm.xlu0 %525, %v471
    %v527 = vpop.permute.xlu0 %526
    %528 = vset.pattern.permute.xlu0 0
    %529 = vperm.xlu0 %528, %v473
    %v530 = vpop.permute.xlu0 %529
    %531 = vset.pattern.permute.xlu0 0
    %532 = vperm.xlu0 %531, %v475
    %v533 = vpop.permute.xlu0 %532
    %534 = vset.pattern.permute.xlu0 0
    %535 = vperm.xlu0 %534, %v477
    %v536 = vpop.permute.xlu0 %535
    %537 = vset.pattern.permute.xlu0 0
    %538 = vperm.xlu0 %537, %v479
    %v539 = vpop.permute.xlu0 %538
    %540 = vset.pattern.permute.xlu0 0
    %541 = vperm.xlu0 %540, %v481
    %v542 = vpop.permute.xlu0 %541
    %543 = vset.pattern.permute.xlu0 0
    %544 = vperm.xlu0 %543, %v483
    %v545 = vpop.permute.xlu0 %544
    %546 = vset.pattern.permute.xlu0 0
    %547 = vperm.xlu0 %546, %v485
    %v548 = vpop.permute.xlu0 %547
    %549 = vset.pattern.permute.xlu0 0
    %550 = vperm.xlu0 %549, %v487
    %v551 = vpop.permute.xlu0 %550
    %v552 = vlaneseq
    %v553 = vshrl.u32 %v552, 7
    %v554 = vsub.s32 %v263, %v553
    %v555 = vrot.slane %v506, %v554
    %v556 = vlaneseq
    %v557 = vshrl.u32 %v556, 7
    %v558 = vsub.s32 %v263, %v557
    %v559 = vrot.slane %v509, %v558
    %v560 = vlaneseq
    %v561 = vshrl.u32 %v560, 7
    %v562 = vsub.s32 %v263, %v561
    %v563 = vrot.slane %v512, %v562
    %v564 = vlaneseq
    %v565 = vshrl.u32 %v564, 7
    %v566 = vsub.s32 %v263, %v565
    %v567 = vrot.slane %v515, %v566
    %v568 = vlaneseq
    %v569 = vshrl.u32 %v568, 7
    %v570 = vsub.s32 %v263, %v569
    %v571 = vrot.slane %v518, %v570
    %v572 = vlaneseq
    %v573 = vshrl.u32 %v572, 7
    %v574 = vsub.s32 %v263, %v573
    %v575 = vrot.slane %v521, %v574
    %v576 = vlaneseq
    %v577 = vshrl.u32 %v576, 7
    %v578 = vsub.s32 %v263, %v577
    %v579 = vrot.slane %v524, %v578
    %v580 = vlaneseq
    %v581 = vshrl.u32 %v580, 7
    %v582 = vsub.s32 %v263, %v581
    %v583 = vrot.slane %v527, %v582
    %v584 = vlaneseq
    %v585 = vshrl.u32 %v584, 7
    %v586 = vsub.s32 %v263, %v585
    %v587 = vrot.slane %v530, %v586
    %v588 = vlaneseq
    %v589 = vshrl.u32 %v588, 7
    %v590 = vsub.s32 %v263, %v589
    %v591 = vrot.slane %v533, %v590
    %v592 = vlaneseq
    %v593 = vshrl.u32 %v592, 7
    %v594 = vsub.s32 %v263, %v593
    %v595 = vrot.slane %v536, %v594
    %v596 = vlaneseq
    %v597 = vshrl.u32 %v596, 7
    %v598 = vsub.s32 %v263, %v597
    %v599 = vrot.slane %v539, %v598
    %v600 = vlaneseq
    %v601 = vshrl.u32 %v600, 7
    %v602 = vsub.s32 %v263, %v601
    %v603 = vrot.slane %v542, %v602
    %v604 = vlaneseq
    %v605 = vshrl.u32 %v604, 7
    %v606 = vsub.s32 %v263, %v605
    %v607 = vrot.slane %v545, %v606
    %v608 = vlaneseq
    %v609 = vshrl.u32 %v608, 7
    %v610 = vsub.s32 %v263, %v609
    %v611 = vrot.slane %v548, %v610
    %v612 = vlaneseq
    %v613 = vshrl.u32 %v612, 7
    %v614 = vsub.s32 %v263, %v613
    %v615 = vrot.slane %v551, %v614
    %v616 = vsel %vm328, %v559, %v555
    %v617 = vsel %vm330, %v563, %v616
    %v618 = vsel %vm332, %v567, %v617
    %v619 = vsel %vm334, %v571, %v618
    %v620 = vsel %vm336, %v575, %v619
    %v621 = vsel %vm338, %v579, %v620
    %v622 = vsel %vm340, %v583, %v621
    %v623 = vsel %vm328, %v591, %v587
    %v624 = vsel %vm330, %v595, %v623
    %v625 = vsel %vm332, %v599, %v624
    %v626 = vsel %vm334, %v603, %v625
    %v627 = vsel %vm336, %v607, %v626
    %v628 = vsel %vm338, %v611, %v627
    %v629 = vsel %vm340, %v615, %v628
    %v632 = vsel %vm351, %v622, 0.0
    %633 = vadd.xlane.f32.xlu0 %v632
    %v634 = vpop.xlane.xlu0 %633
    %v635 = vsel %vm351, %v629, 0.0
    %636 = vadd.xlane.f32.xlu0 %v635
    %v637 = vpop.xlane.xlu0 %636
    %v640 = vlaneseq
    %v641 = vshrl.u32 %v640, 7
    %v642 = vsub.s32 0, %v641
    %v643 = vrot.slane %v634, %v642
    %v644 = vlaneseq
    %v645 = vshrl.u32 %v644, 7
    %v646 = vsub.s32 1, %v645
    %v647 = vrot.slane %v634, %v646
    %v648 = vlaneseq
    %v649 = vshrl.u32 %v648, 7
    %v650 = vsub.s32 2, %v649
    %v651 = vrot.slane %v634, %v650
    %v652 = vlaneseq
    %v653 = vshrl.u32 %v652, 7
    %v654 = vsub.s32 3, %v653
    %v655 = vrot.slane %v634, %v654
    %v656 = vlaneseq
    %v657 = vshrl.u32 %v656, 7
    %v658 = vsub.s32 4, %v657
    %v659 = vrot.slane %v634, %v658
    %v660 = vlaneseq
    %v661 = vshrl.u32 %v660, 7
    %v662 = vsub.s32 5, %v661
    %v663 = vrot.slane %v634, %v662
    %v664 = vlaneseq
    %v665 = vshrl.u32 %v664, 7
    %v666 = vsub.s32 6, %v665
    %v667 = vrot.slane %v634, %v666
    %v668 = vlaneseq
    %v669 = vshrl.u32 %v668, 7
    %v670 = vsub.s32 7, %v669
    %v671 = vrot.slane %v634, %v670
    %v672 = vlaneseq
    %v673 = vshrl.u32 %v672, 7
    %v674 = vsub.s32 0, %v673
    %v675 = vrot.slane %v637, %v674
    %v676 = vlaneseq
    %v677 = vshrl.u32 %v676, 7
    %v678 = vsub.s32 1, %v677
    %v679 = vrot.slane %v637, %v678
    %v680 = vlaneseq
    %v681 = vshrl.u32 %v680, 7
    %v682 = vsub.s32 2, %v681
    %v683 = vrot.slane %v637, %v682
    %v684 = vlaneseq
    %v685 = vshrl.u32 %v684, 7
    %v686 = vsub.s32 3, %v685
    %v687 = vrot.slane %v637, %v686
    %v688 = vlaneseq
    %v689 = vshrl.u32 %v688, 7
    %v690 = vsub.s32 4, %v689
    %v691 = vrot.slane %v637, %v690
    %v692 = vlaneseq
    %v693 = vshrl.u32 %v692, 7
    %v694 = vsub.s32 5, %v693
    %v695 = vrot.slane %v637, %v694
    %v696 = vlaneseq
    %v697 = vshrl.u32 %v696, 7
    %v698 = vsub.s32 6, %v697
    %v699 = vrot.slane %v637, %v698
    %v700 = vlaneseq
    %v701 = vshrl.u32 %v700, 7
    %v702 = vsub.s32 7, %v701
    %v703 = vrot.slane %v637, %v702
    %v720 = vrcp.pop %v643
    %v721 = vmul.f32 %v457, %v720
    %v722 = vrcp.pop %v647
    %v723 = vmul.f32 %v459, %v722
    %v724 = vrcp.pop %v651
    %v725 = vmul.f32 %v461, %v724
    %v726 = vrcp.pop %v655
    %v727 = vmul.f32 %v463, %v726
    %v728 = vrcp.pop %v659
    %v729 = vmul.f32 %v465, %v728
    %v730 = vrcp.pop %v663
    %v731 = vmul.f32 %v467, %v730
    %v732 = vrcp.pop %v667
    %v733 = vmul.f32 %v469, %v732
    %v734 = vrcp.pop %v671
    %v735 = vmul.f32 %v471, %v734
    %v736 = vrcp.pop %v675
    %v737 = vmul.f32 %v473, %v736
    %v738 = vrcp.pop %v679
    %v739 = vmul.f32 %v475, %v738
    %v740 = vrcp.pop %v683
    %v741 = vmul.f32 %v477, %v740
    %v742 = vrcp.pop %v687
    %v743 = vmul.f32 %v479, %v742
    %v744 = vrcp.pop %v691
    %v745 = vmul.f32 %v481, %v744
    %v746 = vrcp.pop %v695
    %v747 = vmul.f32 %v483, %v746
    %v748 = vrcp.pop %v699
    %v749 = vmul.f32 %v485, %v748
    %v750 = vrcp.pop %v703
    %v751 = vmul.f32 %v487, %v750
    %753 = vset.pattern.permute.xlu0 0
    %754 = vperm.xlu0 %753, %v721
    %v755 = vpop.permute.xlu0 %754
    %758 = vset.pattern.permute.xlu0 0
    %759 = vperm.xlu0 %758, %v723
    %v760 = vpop.permute.xlu0 %759
    %763 = vset.pattern.permute.xlu0 0
    %764 = vperm.xlu0 %763, %v725
    %v765 = vpop.permute.xlu0 %764
    %768 = vset.pattern.permute.xlu0 0
    %769 = vperm.xlu0 %768, %v727
    %v770 = vpop.permute.xlu0 %769
    %773 = vset.pattern.permute.xlu0 0
    %774 = vperm.xlu0 %773, %v729
    %v775 = vpop.permute.xlu0 %774
    %778 = vset.pattern.permute.xlu0 0
    %779 = vperm.xlu0 %778, %v731
    %v780 = vpop.permute.xlu0 %779
    %783 = vset.pattern.permute.xlu0 0
    %784 = vperm.xlu0 %783, %v733
    %v785 = vpop.permute.xlu0 %784
    %788 = vset.pattern.permute.xlu0 0
    %789 = vperm.xlu0 %788, %v735
    %v790 = vpop.permute.xlu0 %789
    %793 = vset.pattern.permute.xlu0 0
    %794 = vperm.xlu0 %793, %v737
    %v795 = vpop.permute.xlu0 %794
    %798 = vset.pattern.permute.xlu0 0
    %799 = vperm.xlu0 %798, %v739
    %v800 = vpop.permute.xlu0 %799
    %803 = vset.pattern.permute.xlu0 0
    %804 = vperm.xlu0 %803, %v741
    %v805 = vpop.permute.xlu0 %804
    %808 = vset.pattern.permute.xlu0 0
    %809 = vperm.xlu0 %808, %v743
    %v810 = vpop.permute.xlu0 %809
    %813 = vset.pattern.permute.xlu0 0
    %814 = vperm.xlu0 %813, %v745
    %v815 = vpop.permute.xlu0 %814
    %818 = vset.pattern.permute.xlu0 0
    %819 = vperm.xlu0 %818, %v747
    %v820 = vpop.permute.xlu0 %819
    %823 = vset.pattern.permute.xlu0 0
    %824 = vperm.xlu0 %823, %v749
    %v825 = vpop.permute.xlu0 %824
    %828 = vset.pattern.permute.xlu0 0
    %829 = vperm.xlu0 %828, %v751
    %v830 = vpop.permute.xlu0 %829
    %v832 = vmul.f32 %v74, %v755
    %v833 = vmul.f32 %v75, %v760
    %v834 = vmul.f32 %v76, %v765
    %v835 = vmul.f32 %v77, %v770
    %v836 = vmul.f32 %v78, %v775
    %v837 = vmul.f32 %v79, %v780
    %v838 = vmul.f32 %v80, %v785
    %v839 = vmul.f32 %v81, %v790
    %v840 = vmul.f32 %v82, %v795
    %v841 = vmul.f32 %v83, %v800
    %v842 = vmul.f32 %v84, %v805
    %v843 = vmul.f32 %v85, %v810
    %v844 = vmul.f32 %v86, %v815
    %v845 = vmul.f32 %v87, %v820
    %v846 = vmul.f32 %v88, %v825
    %v847 = vmul.f32 %v89, %v830
    %v848 = vsel %vm197, %v832, 0.0
    %v849 = vrot.slane %v848, 4
    %v850 = vadd.f32 %v848, %v849
    %v851 = vrot.slane %v850, 2
    %v852 = vadd.f32 %v850, %v851
    %v853 = vrot.slane %v852, 1
    %v854 = vadd.f32 %v852, %v853
    %v855 = vsel %vm197, %v833, 0.0
    %v856 = vrot.slane %v855, 4
    %v857 = vadd.f32 %v855, %v856
    %v858 = vrot.slane %v857, 2
    %v859 = vadd.f32 %v857, %v858
    %v860 = vrot.slane %v859, 1
    %v861 = vadd.f32 %v859, %v860
    %v862 = vsel %vm197, %v834, 0.0
    %v863 = vrot.slane %v862, 4
    %v864 = vadd.f32 %v862, %v863
    %v865 = vrot.slane %v864, 2
    %v866 = vadd.f32 %v864, %v865
    %v867 = vrot.slane %v866, 1
    %v868 = vadd.f32 %v866, %v867
    %v869 = vsel %vm197, %v835, 0.0
    %v870 = vrot.slane %v869, 4
    %v871 = vadd.f32 %v869, %v870
    %v872 = vrot.slane %v871, 2
    %v873 = vadd.f32 %v871, %v872
    %v874 = vrot.slane %v873, 1
    %v875 = vadd.f32 %v873, %v874
    %v876 = vsel %vm197, %v836, 0.0
    %v877 = vrot.slane %v876, 4
    %v878 = vadd.f32 %v876, %v877
    %v879 = vrot.slane %v878, 2
    %v880 = vadd.f32 %v878, %v879
    %v881 = vrot.slane %v880, 1
    %v882 = vadd.f32 %v880, %v881
    %v883 = vsel %vm197, %v837, 0.0
    %v884 = vrot.slane %v883, 4
    %v885 = vadd.f32 %v883, %v884
    %v886 = vrot.slane %v885, 2
    %v887 = vadd.f32 %v885, %v886
    %v888 = vrot.slane %v887, 1
    %v889 = vadd.f32 %v887, %v888
    %v890 = vsel %vm197, %v838, 0.0
    %v891 = vrot.slane %v890, 4
    %v892 = vadd.f32 %v890, %v891
    %v893 = vrot.slane %v892, 2
    %v894 = vadd.f32 %v892, %v893
    %v895 = vrot.slane %v894, 1
    %v896 = vadd.f32 %v894, %v895
    %v897 = vsel %vm197, %v839, 0.0
    %v898 = vrot.slane %v897, 4
    %v899 = vadd.f32 %v897, %v898
    %v900 = vrot.slane %v899, 2
    %v901 = vadd.f32 %v899, %v900
    %v902 = vrot.slane %v901, 1
    %v903 = vadd.f32 %v901, %v902
    %v904 = vsel %vm197, %v840, 0.0
    %v905 = vrot.slane %v904, 4
    %v906 = vadd.f32 %v904, %v905
    %v907 = vrot.slane %v906, 2
    %v908 = vadd.f32 %v906, %v907
    %v909 = vrot.slane %v908, 1
    %v910 = vadd.f32 %v908, %v909
    %v911 = vsel %vm197, %v841, 0.0
    %v912 = vrot.slane %v911, 4
    %v913 = vadd.f32 %v911, %v912
    %v914 = vrot.slane %v913, 2
    %v915 = vadd.f32 %v913, %v914
    %v916 = vrot.slane %v915, 1
    %v917 = vadd.f32 %v915, %v916
    %v918 = vsel %vm197, %v842, 0.0
    %v919 = vrot.slane %v918, 4
    %v920 = vadd.f32 %v918, %v919
    %v921 = vrot.slane %v920, 2
    %v922 = vadd.f32 %v920, %v921
    %v923 = vrot.slane %v922, 1
    %v924 = vadd.f32 %v922, %v923
    %v925 = vsel %vm197, %v843, 0.0
    %v926 = vrot.slane %v925, 4
    %v927 = vadd.f32 %v925, %v926
    %v928 = vrot.slane %v927, 2
    %v929 = vadd.f32 %v927, %v928
    %v930 = vrot.slane %v929, 1
    %v931 = vadd.f32 %v929, %v930
    %v932 = vsel %vm197, %v844, 0.0
    %v933 = vrot.slane %v932, 4
    %v934 = vadd.f32 %v932, %v933
    %v935 = vrot.slane %v934, 2
    %v936 = vadd.f32 %v934, %v935
    %v937 = vrot.slane %v936, 1
    %v938 = vadd.f32 %v936, %v937
    %v939 = vsel %vm197, %v845, 0.0
    %v940 = vrot.slane %v939, 4
    %v941 = vadd.f32 %v939, %v940
    %v942 = vrot.slane %v941, 2
    %v943 = vadd.f32 %v941, %v942
    %v944 = vrot.slane %v943, 1
    %v945 = vadd.f32 %v943, %v944
    %v946 = vsel %vm197, %v846, 0.0
    %v947 = vrot.slane %v946, 4
    %v948 = vadd.f32 %v946, %v947
    %v949 = vrot.slane %v948, 2
    %v950 = vadd.f32 %v948, %v949
    %v951 = vrot.slane %v950, 1
    %v952 = vadd.f32 %v950, %v951
    %v953 = vsel %vm197, %v847, 0.0
    %v954 = vrot.slane %v953, 4
    %v955 = vadd.f32 %v953, %v954
    %v956 = vrot.slane %v955, 2
    %v957 = vadd.f32 %v955, %v956
    %v958 = vrot.slane %v957, 1
    %v959 = vadd.f32 %v957, %v958
    %v960 = vld [vmem:[%s4] sm:$0x3]
    %v961 = vld [vmem:[#allocation7] sm:$0xff]
    %v962 = vld [vmem:[#allocation7 + $0x8] sm:$0xff]
    %v963 = vld [vmem:[#allocation7 + $0x10] sm:$0xff]
    %v964 = vld [vmem:[#allocation7 + $0x18] sm:$0xff]
    %s965 = scalar_lea.vmem [#allocation7], 32
    %v966 = vld [vmem:[%s965] sm:$0xff]
    %v967 = vld [vmem:[%s965 + $0x8] sm:$0xff]
    %v968 = vld [vmem:[%s965 + $0x10] sm:$0xff]
    %v969 = vld [vmem:[%s965 + $0x18] sm:$0xff]
    %v978 = vsel %vm328, %v917, %v910
    %v979 = vsel %vm330, %v924, %v978
    %v980 = vsel %vm332, %v931, %v979
    %v981 = vsel %vm334, %v938, %v980
    %v982 = vsel %vm336, %v945, %v981
    %v983 = vsel %vm338, %v952, %v982
    %v984 = vsel %vm340, %v959, %v983
    %v985 = vsel %vm197, %v984, 0
    %987 = vmatprep.subr.mxu0 0.0
    %988 = vmatpush1.msra.mxu0 %v966
    %989 = vmatprep.subr.mxu0 0.0
    %990 = vmatpush1.msra.mxu0 %v967
    %991 = vmatprep.subr.mxu0 0.0
    %992 = vmatpush1.msra.mxu0 %v968
    %993 = vmatprep.subr.mxu0 0.0
    %994 = vmatpush1.msra.mxu0 %v969
    %995 = vmatprep.subr.mxu0 0.0
    %996 = vmatpush1.msra.mxu0 0.0
    %997 = vmatprep.subr.mxu0 0.0
    %998 = vmatpush1.msra.mxu0 0.0
    %999 = vmatprep.subr.mxu0 0.0
    %1000 = vmatpush1.msra.mxu0 0.0
    %1001 = vmatprep.subr.mxu0 0.0
    %1002 = vmatpush1.msra.mxu0 0.0
    %1003 = vmatprep.subr.mxu0 0.0
    %1004 = vmatpush1.msra.mxu0 0.0
    %1005 = vmatprep.subr.mxu0 0.0
    %1006 = vmatpush1.msra.mxu0 0.0
    %1007 = vmatprep.subr.mxu0 0.0
    %1008 = vmatpush1.msra.mxu0 0.0
    %1009 = vmatprep.subr.mxu0 0.0
    %1010 = vmatpush1.msra.mxu0 0.0
    %1011 = vmatprep.subr.mxu0 0.0
    %1012 = vmatpush1.msra.mxu0 0.0
    %1013 = vmatprep.subr.mxu0 0.0
    %1014 = vmatpush1.msra.mxu0 0.0
    %1015 = vmatprep.subr.mxu0 0.0
    %1016 = vmatpush1.msra.mxu0 0.0
    %1017 = vmatprep.subr.mxu0 0.0
    %1018 = vmatpush1.msra.mxu0 0.0
    %1019 = vmatprep.subr.mxu0 0.0
    %1020 = vmatpush1.msra.mxu0 0.0
    %1021 = vmatprep.subr.mxu0 0.0
    %1022 = vmatpush1.msra.mxu0 0.0
    %1023 = vmatprep.subr.mxu0 0.0
    %1024 = vmatpush1.msra.mxu0 0.0
    %1025 = vmatprep.subr.mxu0 0.0
    %1026 = vmatpush1.msra.mxu0 0.0
    %1027 = vmatprep.subr.mxu0 0.0
    %1028 = vmatpush1.msra.mxu0 0.0
    %1029 = vmatprep.subr.mxu0 0.0
    %1030 = vmatpush1.msra.mxu0 0.0
    %1031 = vmatprep.subr.mxu0 0.0
    %1032 = vmatpush1.msra.mxu0 0.0
    %1033 = vmatprep.subr.mxu0 0.0
    %1034 = vmatpush1.msra.mxu0 0.0
    %1035 = vmatprep.subr.mxu0 0.0
    %1036 = vmatpush1.msra.mxu0 0.0
    %1037 = vmatprep.subr.mxu0 0.0
    %1038 = vmatpush1.msra.mxu0 0.0
    %1039 = vmatprep.subr.mxu0 0.0
    %1040 = vmatpush1.msra.mxu0 0.0
    %1041 = vmatprep.subr.mxu0 0.0
    %1042 = vmatpush1.msra.mxu0 0.0
    %1043 = vmatprep.subr.mxu0 0.0
    %1044 = vmatpush1.msra.mxu0 0.0
    %1045 = vmatprep.subr.mxu0 0.0
    %1046 = vmatpush1.msra.mxu0 0.0
    %1047 = vmatprep.subr.mxu0 0.0
    %1048 = vmatpush1.msra.mxu0 0.0
    %1049 = vmatprep.subr.mxu0 0.0
    %1050 = vmatpush1.msra.mxu0 0.0
    %1051 = vmatprep.mubr.f32.mxu0 0.0
    %1052 = vmatmul.mubr.f32.gmra.mrb[0].mxu0 %v985
    %v1053 = vpop.f32.mrb[0].mxu0
    %v1054 = vadd.f32 0.0, %v1053
    %v1055 = vpop.f32.mrb[0].mxu0
    %1056 = vdwg.mxu0
    %v1065 = vsel %vm328, %v861, %v854
    %v1066 = vsel %vm330, %v868, %v1065
    %v1067 = vsel %vm332, %v875, %v1066
    %v1068 = vsel %vm334, %v882, %v1067
    %v1069 = vsel %vm336, %v889, %v1068
    %v1070 = vsel %vm338, %v896, %v1069
    %v1071 = vsel %vm340, %v903, %v1070
    %v1072 = vsel %vm197, %v1071, 0
    %1074 = vmatprep.subr.mxu0 0.0
    %1075 = vmatpush1.msra.mxu0 %v961
    %1076 = vmatprep.subr.mxu0 0.0
    %1077 = vmatpush1.msra.mxu0 %v962
    %1078 = vmatprep.subr.mxu0 0.0
    %1079 = vmatpush1.msra.mxu0 %v963
    %1080 = vmatprep.subr.mxu0 0.0
    %1081 = vmatpush1.msra.mxu0 %v964
    %1082 = vmatprep.subr.mxu0 0.0
    %1083 = vmatpush1.msra.mxu0 0.0
    %1084 = vmatprep.subr.mxu0 0.0
    %1085 = vmatpush1.msra.mxu0 0.0
    %1086 = vmatprep.subr.mxu0 0.0
    %1087 = vmatpush1.msra.mxu0 0.0
    %1088 = vmatprep.subr.mxu0 0.0
    %1089 = vmatpush1.msra.mxu0 0.0
    %1090 = vmatprep.subr.mxu0 0.0
    %1091 = vmatpush1.msra.mxu0 0.0
    %1092 = vmatprep.subr.mxu0 0.0
    %1093 = vmatpush1.msra.mxu0 0.0
    %1094 = vmatprep.subr.mxu0 0.0
    %1095 = vmatpush1.msra.mxu0 0.0
    %1096 = vmatprep.subr.mxu0 0.0
    %1097 = vmatpush1.msra.mxu0 0.0
    %1098 = vmatprep.subr.mxu0 0.0
    %1099 = vmatpush1.msra.mxu0 0.0
    %1100 = vmatprep.subr.mxu0 0.0
    %1101 = vmatpush1.msra.mxu0 0.0
    %1102 = vmatprep.subr.mxu0 0.0
    %1103 = vmatpush1.msra.mxu0 0.0
    %1104 = vmatprep.subr.mxu0 0.0
    %1105 = vmatpush1.msra.mxu0 0.0
    %1106 = vmatprep.subr.mxu0 0.0
    %1107 = vmatpush1.msra.mxu0 0.0
    %1108 = vmatprep.subr.mxu0 0.0
    %1109 = vmatpush1.msra.mxu0 0.0
    %1110 = vmatprep.subr.mxu0 0.0
    %1111 = vmatpush1.msra.mxu0 0.0
    %1112 = vmatprep.subr.mxu0 0.0
    %1113 = vmatpush1.msra.mxu0 0.0
    %1114 = vmatprep.subr.mxu0 0.0
    %1115 = vmatpush1.msra.mxu0 0.0
    %1116 = vmatprep.subr.mxu0 0.0
    %1117 = vmatpush1.msra.mxu0 0.0
    %1118 = vmatprep.subr.mxu0 0.0
    %1119 = vmatpush1.msra.mxu0 0.0
    %1120 = vmatprep.subr.mxu0 0.0
    %1121 = vmatpush1.msra.mxu0 0.0
    %1122 = vmatprep.subr.mxu0 0.0
    %1123 = vmatpush1.msra.mxu0 0.0
    %1124 = vmatprep.subr.mxu0 0.0
    %1125 = vmatpush1.msra.mxu0 0.0
    %1126 = vmatprep.subr.mxu0 0.0
    %1127 = vmatpush1.msra.mxu0 0.0
    %1128 = vmatprep.subr.mxu0 0.0
    %1129 = vmatpush1.msra.mxu0 0.0
    %1130 = vmatprep.subr.mxu0 0.0
    %1131 = vmatpush1.msra.mxu0 0.0
    %1132 = vmatprep.subr.mxu0 0.0
    %1133 = vmatpush1.msra.mxu0 0.0
    %1134 = vmatprep.subr.mxu0 0.0
    %1135 = vmatpush1.msra.mxu0 0.0
    %1136 = vmatprep.subr.mxu0 0.0
    %1137 = vmatpush1.msra.mxu0 0.0
    %1138 = vmatprep.mubr.f32.mxu0 0.0
    %1139 = vmatmul.mubr.f32.gmra.mrb[0].mxu0 %v1072
    %v1140 = vpop.f32.mrb[0].mxu0
    %v1141 = vadd.f32 %v1054, %v1140
    %v1142 = vpop.f32.mrb[0].mxu0
    %1143 = vdwg.mxu0
    %s1144 = scalar_lea.vmem [#allocation7], 64
    %v1145 = vld [vmem:[%s1144] sm:$0xff]
    %v1146 = vld [vmem:[%s1144 + $0x8] sm:$0xff]
    %v1147 = vld [vmem:[%s1144 + $0x10] sm:$0xff]
    %v1148 = vld [vmem:[%s1144 + $0x18] sm:$0xff]
    %v1149 = vsel %vm197, %v90, 0
    %1151 = vmatprep.subr.mxu0 0.0
    %1152 = vmatpush1.msra.mxu0 %v1145
    %1153 = vmatprep.subr.mxu0 0.0
    %1154 = vmatpush1.msra.mxu0 %v1146
    %1155 = vmatprep.subr.mxu0 0.0
    %1156 = vmatpush1.msra.mxu0 %v1147
    %1157 = vmatprep.subr.mxu0 0.0
    %1158 = vmatpush1.msra.mxu0 %v1148
    %1159 = vmatprep.subr.mxu0 0.0
    %1160 = vmatpush1.msra.mxu0 0.0
    %1161 = vmatprep.subr.mxu0 0.0
    %1162 = vmatpush1.msra.mxu0 0.0
    %1163 = vmatprep.subr.mxu0 0.0
    %1164 = vmatpush1.msra.mxu0 0.0
    %1165 = vmatprep.subr.mxu0 0.0
    %1166 = vmatpush1.msra.mxu0 0.0
    %1167 = vmatprep.subr.mxu0 0.0
    %1168 = vmatpush1.msra.mxu0 0.0
    %1169 = vmatprep.subr.mxu0 0.0
    %1170 = vmatpush1.msra.mxu0 0.0
    %1171 = vmatprep.subr.mxu0 0.0
    %1172 = vmatpush1.msra.mxu0 0.0
    %1173 = vmatprep.subr.mxu0 0.0
    %1174 = vmatpush1.msra.mxu0 0.0
    %1175 = vmatprep.subr.mxu0 0.0
    %1176 = vmatpush1.msra.mxu0 0.0
    %1177 = vmatprep.subr.mxu0 0.0
    %1178 = vmatpush1.msra.mxu0 0.0
    %1179 = vmatprep.subr.mxu0 0.0
    %1180 = vmatpush1.msra.mxu0 0.0
    %1181 = vmatprep.subr.mxu0 0.0
    %1182 = vmatpush1.msra.mxu0 0.0
    %1183 = vmatprep.subr.mxu0 0.0
    %1184 = vmatpush1.msra.mxu0 0.0
    %1185 = vmatprep.subr.mxu0 0.0
    %1186 = vmatpush1.msra.mxu0 0.0
    %1187 = vmatprep.subr.mxu0 0.0
    %1188 = vmatpush1.msra.mxu0 0.0
    %1189 = vmatprep.subr.mxu0 0.0
    %1190 = vmatpush1.msra.mxu0 0.0
    %1191 = vmatprep.subr.mxu0 0.0
    %1192 = vmatpush1.msra.mxu0 0.0
    %1193 = vmatprep.subr.mxu0 0.0
    %1194 = vmatpush1.msra.mxu0 0.0
    %1195 = vmatprep.subr.mxu0 0.0
    %1196 = vmatpush1.msra.mxu0 0.0
    %1197 = vmatprep.subr.mxu0 0.0
    %1198 = vmatpush1.msra.mxu0 0.0
    %1199 = vmatprep.subr.mxu0 0.0
    %1200 = vmatpush1.msra.mxu0 0.0
    %1201 = vmatprep.subr.mxu0 0.0
    %1202 = vmatpush1.msra.mxu0 0.0
    %1203 = vmatprep.subr.mxu0 0.0
    %1204 = vmatpush1.msra.mxu0 0.0
    %1205 = vmatprep.subr.mxu0 0.0
    %1206 = vmatpush1.msra.mxu0 0.0
    %1207 = vmatprep.subr.mxu0 0.0
    %1208 = vmatpush1.msra.mxu0 0.0
    %1209 = vmatprep.subr.mxu0 0.0
    %1210 = vmatpush1.msra.mxu0 0.0
    %1211 = vmatprep.subr.mxu0 0.0
    %1212 = vmatpush1.msra.mxu0 0.0
    %1213 = vmatprep.subr.mxu0 0.0
    %1214 = vmatpush1.msra.mxu0 0.0
    %1215 = vmatprep.mubr.f32.mxu0 0.0
    %1216 = vmatmul.mubr.f32.gmra.mrb[0].mxu0 %v1149
    %v1217 = vpop.f32.mrb[0].mxu0
    %v1218 = vadd.f32 0.0, %v1217
    %v1219 = vpop.f32.mrb[0].mxu0
    %1220 = vdwg.mxu0
    %v1221 = vadd.f32 %v1141, %v1218
    %v1222 = vlaneseq
    %v1223 = vshrl.u32 %v1222, 7
    %v1224 = vsub.s32 0, %v1223
    %v1225 = vrot.slane %v960, %v1224
    %v1226 = vadd.f32 %v1221, %v1225
    %v1227 = vtanh.pop %v1226
    %v1228 = vld [vmem:[#allocation8] sm:$0xff]
    %v1229 = vld [vmem:[#allocation8 + $0x8] sm:$0xff]
    %v1230 = vld [vmem:[#allocation8 + $0x10] sm:$0xff]
    %v1231 = vld [vmem:[#allocation8 + $0x18] sm:$0xff]
    %v1232 = vlaneseq
    %v1233 = vshrl.u32 %v1232, 7
    %v1234 = vsub.s32 1, %v1233
    %v1235 = vrot.slane %v960, %v1234
    %v1237 = vsel %vm197, %v1227, 0
    %1239 = vmatprep.subr.mxu0 0.0
    %1240 = vmatpush1.msra.mxu0 %v1228
    %1241 = vmatprep.subr.mxu0 0.0
    %1242 = vmatpush1.msra.mxu0 %v1229
    %1243 = vmatprep.subr.mxu0 0.0
    %1244 = vmatpush1.msra.mxu0 %v1230
    %1245 = vmatprep.subr.mxu0 0.0
    %1246 = vmatpush1.msra.mxu0 %v1231
    %1247 = vmatprep.subr.mxu0 0.0
    %1248 = vmatpush1.msra.mxu0 0.0
    %1249 = vmatprep.subr.mxu0 0.0
    %1250 = vmatpush1.msra.mxu0 0.0
    %1251 = vmatprep.subr.mxu0 0.0
    %1252 = vmatpush1.msra.mxu0 0.0
    %1253 = vmatprep.subr.mxu0 0.0
    %1254 = vmatpush1.msra.mxu0 0.0
    %1255 = vmatprep.subr.mxu0 0.0
    %1256 = vmatpush1.msra.mxu0 0.0
    %1257 = vmatprep.subr.mxu0 0.0
    %1258 = vmatpush1.msra.mxu0 0.0
    %1259 = vmatprep.subr.mxu0 0.0
    %1260 = vmatpush1.msra.mxu0 0.0
    %1261 = vmatprep.subr.mxu0 0.0
    %1262 = vmatpush1.msra.mxu0 0.0
    %1263 = vmatprep.subr.mxu0 0.0
    %1264 = vmatpush1.msra.mxu0 0.0
    %1265 = vmatprep.subr.mxu0 0.0
    %1266 = vmatpush1.msra.mxu0 0.0
    %1267 = vmatprep.subr.mxu0 0.0
    %1268 = vmatpush1.msra.mxu0 0.0
    %1269 = vmatprep.subr.mxu0 0.0
    %1270 = vmatpush1.msra.mxu0 0.0
    %1271 = vmatprep.subr.mxu0 0.0
    %1272 = vmatpush1.msra.mxu0 0.0
    %1273 = vmatprep.subr.mxu0 0.0
    %1274 = vmatpush1.msra.mxu0 0.0
    %1275 = vmatprep.subr.mxu0 0.0
    %1276 = vmatpush1.msra.mxu0 0.0
    %1277 = vmatprep.subr.mxu0 0.0
    %1278 = vmatpush1.msra.mxu0 0.0
    %1279 = vmatprep.subr.mxu0 0.0
    %1280 = vmatpush1.msra.mxu0 0.0
    %1281 = vmatprep.subr.mxu0 0.0
    %1282 = vmatpush1.msra.mxu0 0.0
    %1283 = vmatprep.subr.mxu0 0.0
    %1284 = vmatpush1.msra.mxu0 0.0
    %1285 = vmatprep.subr.mxu0 0.0
    %1286 = vmatpush1.msra.mxu0 0.0
    %1287 = vmatprep.subr.mxu0 0.0
    %1288 = vmatpush1.msra.mxu0 0.0
    %1289 = vmatprep.subr.mxu0 0.0
    %1290 = vmatpush1.msra.mxu0 0.0
    %1291 = vmatprep.subr.mxu0 0.0
    %1292 = vmatpush1.msra.mxu0 0.0
    %1293 = vmatprep.subr.mxu0 0.0
    %1294 = vmatpush1.msra.mxu0 0.0
    %1295 = vmatprep.subr.mxu0 0.0
    %1296 = vmatpush1.msra.mxu0 0.0
    %1297 = vmatprep.subr.mxu0 0.0
    %1298 = vmatpush1.msra.mxu0 0.0
    %1299 = vmatprep.subr.mxu0 0.0
    %1300 = vmatpush1.msra.mxu0 0.0
    %1301 = vmatprep.subr.mxu0 0.0
    %1302 = vmatpush1.msra.mxu0 0.0
    %1303 = vmatprep.mubr.f32.mxu0 0.0
    %1304 = vmatmul.mubr.f32.gmra.mrb[0].mxu0 %v1237
    %v1305 = vpop.f32.mrb[0].mxu0
    %v1306 = vadd.f32 %v1235, %v1305
    %v1307 = vpop.f32.mrb[0].mxu0
    %1308 = vdwg.mxu0
    %1309 = vmax.xlane.f32.xlu0 %v1306
    %v1310 = vpop.xlane.xlu0 %1309
    %v1311 = vsub.f32 %v1306, %v1310
    %v1312 = vmul.f32 %v1311, 1.442695
    %v1313 = vpow.pop %v1312
    %1314 = vadd.xlane.f32.xlu0 %v1313
    %v1315 = vpop.xlane.xlu0 %1314
    %v1316 = vlog2.pop %v1315
    %v1317 = vmul.f32 %v1316, 0.6931472
    %v1318 = vsub.f32 %v1311, %v1317
    %1319 = vst [vmem:[#allocation10] sm:$0xff] %v1318
    // Predicated region
    $region38: #{tpu_custom_call.1} parent=1 // pred_check
      _
    $region39: #{tpu_custom_call.1} parent=1 // pred_check_branch
      %1321 = sbr.rel (0) target = $region41
    $region40: #{tpu_custom_call.1} parent=1 // pred_region
      %s1323 = ssub.s32 128, 128
      %1324 = vsyncadd [#allocation4], %s1323
      %s1326 = sshll.u32 [#allocation10], 4
      %s1327 = int_to_ptr.vmem [resolvable:$true] %s1326
      %1329 = dma.vmem_to_hbm [thread:$0]  %s1327, 128, %s5, [#allocation4]
    $region41: #{tpu_custom_call.1} parent=1 // pred_fallthru
      _
    // Predicated region
    $region42: #{tpu_custom_call.1} parent=1 // pred_check
      _
    $region43: #{tpu_custom_call.1} parent=1 // pred_check_branch
      %1331 = sbr.rel (0) target = $region45
    $region44: #{tpu_custom_call.1} parent=1 // pred_region
      %1332 = dma.done [#allocation4], 128
    $region45: #{tpu_custom_call.1} parent=1 // pred_fallthru
      _
    %1333 = vsyncpa [#allocation3], 1
    %1334 = vsyncpa [#allocation6], 1
    %1335 = vsyncpa [#allocation9], 1
    %1336 = vsyncpa [#allocation4], 1

</llo_original>
